<compile_context>
chip_gen: v7x
topology: tpu7x:2x2x1
jax: 0.10.0
libtpu: 0.0.40
codegen_flags: <defaults>
</compile_context>

<pallas_src>
import jax
import jax.numpy as jnp
from jax.experimental import pallas as pl
from jax.experimental.pallas import tpu as pltpu

_LANE = 128
_SUBLANE = 8


def _round_up(x, m):
    return ((x + m - 1) // m) * m


def _round_down(x, m):
    return (x // m) * m


def _affine_flow_kernel(z_ref, mu_ref, scale_ref, x_ref):
    # z_ref:     (TB, TL) tile of inputs
    # mu_ref:    (1, TL)  broadcast tile of p1
    # scale_ref: (1, TL)  broadcast tile of exp(p2)
    z = z_ref[...].astype(jnp.float32)
    x_ref[...] = (mu_ref[...] + scale_ref[...] * z).astype(x_ref.dtype)


def _vmem_capacity_bytes():
    try:
        return int(pltpu.get_tpu_info().vmem_capacity_bytes)
    except Exception:
        return 64 << 20  # conservative fallback (v7x per-TensorCore VMEM)


def trainable_affine_flow_forward(z, p1, p2):
    """Forward pass of TrainableAffineFlow.

    Args:
      z:  (B, dim) array
      p1: (dim,)   mu parameter
      p2: (dim,)   log-sigma parameter
    Returns:
      (x, logJ) with x of shape/dtype of z and logJ a scalar float32.
    """
    B, dim = z.shape
    out_dtype = z.dtype
    itemsize = jnp.dtype(z.dtype).itemsize

    # Tiny (dim,)-sized work hoisted out of the per-tile path.
    p2f = p2.astype(jnp.float32)
    logJ = jnp.sum(p2f)
    mu_2d = p1.astype(jnp.float32).reshape(1, dim)
    scale_2d = jnp.exp(p2f).reshape(1, dim)

    # ---- Per-generation tile sizing (bytes, not rows) ---------------------
    phys_vmem = _vmem_capacity_bytes()
    # Budget for the pipelined z/x buffers: at most ~28 MiB, never more than
    # half of physical VMEM (v7x: 64 MiB phys -> 28 MiB; v5e/v6e: 28 MiB).
    total_budget = min(28 << 20, phys_vmem // 2)
    tile_budget = total_budget // 4  # 2 double-buffered input + 2 output bufs

    if dim % _LANE == 0 and _SUBLANE * dim * itemsize > tile_budget:
        # Pathologically wide rows: tile the lane axis too.
        TL = max(_LANE, _round_down(tile_budget // (_SUBLANE * itemsize), _LANE))
        TB = _SUBLANE
    else:
        # Lane block covers the full feature dim (legal for any dim because a
        # block dim equal to the full array dim needs no 128-alignment; the
        # tail lanes just take masked stores instead of wrapper-side padding).
        TL = dim
        tb_rows = max(
            _SUBLANE,
            _round_down(tile_budget // max(1, TL * itemsize), _SUBLANE))
        TB = min(tb_rows, _round_up(B, _SUBLANE))
        # Aim for >= 4 grid steps when there is enough work, so both v7x
        # TensorCores get >= 2 blocks each under "parallel" sharding.
        if B > 4 * _SUBLANE:
            TB = min(TB, _round_up(pl.cdiv(B, 4), _SUBLANE))
        if TB >= B:
            TB = B  # single full row block (always a legal block dim)

    grid = (pl.cdiv(B, TB), pl.cdiv(dim, TL))

    # Explicit VMEM limit: covers the pipelined footprint plus headroom and,
    # in particular, exceeds the 16 MiB scoped default on v5e.
    footprint = 4 * TB * TL * itemsize + 8 * TL * 4
    vmem_limit = int(min(phys_vmem * 3 // 4,
                         max(32 << 20, footprint + (8 << 20))))

    cost = pl.CostEstimate(
        flops=2 * B * dim,
        transcendentals=0,
        bytes_accessed=2 * B * dim * itemsize + 2 * dim * 4)

    x = pl.pallas_call(
        _affine_flow_kernel,
        out_shape=jax.ShapeDtypeStruct((B, dim), out_dtype),
        grid=grid,
        in_specs=[
            pl.BlockSpec((TB, TL), lambda i, j: (i, j)),   # z tile (pipelined)
            pl.BlockSpec((1, TL), lambda i, j: (0, j)),    # mu (resident)
            pl.BlockSpec((1, TL), lambda i, j: (0, j)),    # scale (resident)
        ],
        out_specs=pl.BlockSpec((TB, TL), lambda i, j: (i, j)),
        compiler_params=pltpu.CompilerParams(
            dimension_semantics=("parallel", "parallel"),
            vmem_limit_bytes=vmem_limit),
        cost_estimate=cost,
    )(z, mu_2d, scale_2d)

    return x, logJ


if __name__ == "__main__":
    # Module __init__ defaults: dim=2, p1 = zeros(dim), p2 = ones(dim)
    dim = 2
    batch = 8

    p1 = jnp.zeros((dim,), dtype=jnp.float32)
    p2 = jnp.ones((dim,), dtype=jnp.float32)

    key = jax.random.PRNGKey(0)
    z = jax.random.normal(key, (batch, dim), dtype=jnp.float32)

    x, logJ = trainable_affine_flow_forward(z, p1, p2)
    x = jax.block_until_ready(x)
    logJ = jax.block_until_ready(logJ)

    # Reference check against plain-JAX semantics of the PyTorch forward.
    x_ref = p1[None, :] + jnp.exp(p2)[None, :] * z
    logJ_ref = jnp.sum(p2)
    assert x.shape == z.shape, "shape mismatch"
    assert jnp.allclose(x, x_ref, rtol=1e-6, atol=1e-6), "x mismatch"
    assert jnp.allclose(logJ, logJ_ref, rtol=1e-6, atol=1e-6), "logJ mismatch"

    # Lane-aligned dim exercising the multi-step row grid + partial last block.
    dim2, batch2 = 256, 300
    p1b = jax.random.normal(jax.random.PRNGKey(1), (dim2,), dtype=jnp.float32)
    p2b = jax.random.normal(jax.random.PRNGKey(2), (dim2,), dtype=jnp.float32) * 0.1
    zb = jax.random.normal(jax.random.PRNGKey(3), (batch2, dim2), dtype=jnp.float32)
    xb, logJb = trainable_affine_flow_forward(zb, p1b, p2b)
    xb = jax.block_until_ready(xb)
    assert jnp.allclose(xb, p1b[None, :] + jnp.exp(p2b)[None, :] * zb,
                        rtol=1e-5, atol=1e-5), "x mismatch (large)"
    assert jnp.allclose(logJb, jnp.sum(p2b), rtol=1e-5, atol=1e-5), \
        "logJ mismatch (large)"

    # Non-128-divisible dim + non-multiple-of-8 batch: full-dim lane block
    # with masked partial row blocks, no wrapper padding.
    dim3, batch3 = 96, 37
    p1c = jax.random.normal(jax.random.PRNGKey(4), (dim3,), dtype=jnp.float32)
    p2c = jax.random.normal(jax.random.PRNGKey(5), (dim3,), dtype=jnp.float32) * 0.1
    zc = jax.random.normal(jax.random.PRNGKey(6), (batch3, dim3), dtype=jnp.float32)
    xc, logJc = trainable_affine_flow_forward(zc, p1c, p2c)
    xc = jax.block_until_ready(xc)
    assert jnp.allclose(xc, p1c[None, :] + jnp.exp(p2c)[None, :] * zc,
                        rtol=1e-5, atol=1e-5), "x mismatch (ragged)"
    assert jnp.allclose(logJc, jnp.sum(p2c), rtol=1e-5, atol=1e-5), \
        "logJ mismatch (ragged)"

    print("KERNEL_OK")
</pallas_src>

<mosaic_0001>
module attributes {stable_mosaic.version = 11 : i64} {
  func.func @_affine_flow_kernel(%arg0: i32, %arg1: i32, %arg2: memref<8x2xf32, #tpu.memory_space<vmem>>, %arg3: memref<1x2xf32, #tpu.memory_space<vmem>>, %arg4: memref<1x2xf32, #tpu.memory_space<vmem>>, %arg5: memref<8x2xf32, #tpu.memory_space<vmem>>) attributes {dimension_semantics = [#tpu.dimension_semantics<parallel>, #tpu.dimension_semantics<parallel>], iteration_bounds = array<i64: 1, 1>, scalar_prefetch = 0 : i64, scratch_operands = 0 : i64, tpu.core_type = #tpu.core_type<tc>, window_params = [{transform_indices = @transform_0, window_bounds = array<i64: 8, 2>}, {transform_indices = @transform_1, window_bounds = array<i64: 1, 2>}, {transform_indices = @transform_2, window_bounds = array<i64: 1, 2>}, {transform_indices = @transform_3, window_bounds = array<i64: 8, 2>}]} {
    %c0 = arith.constant 0 : index
    %c0_0 = arith.constant 0 : index
    %0 = vector.load %arg2[%c0, %c0_0] : memref<8x2xf32, #tpu.memory_space<vmem>>, vector<8x2xf32>
    %c0_1 = arith.constant 0 : index
    %c0_2 = arith.constant 0 : index
    %1 = vector.load %arg3[%c0_1, %c0_2] : memref<1x2xf32, #tpu.memory_space<vmem>>, vector<1x2xf32>
    %c0_3 = arith.constant 0 : index
    %c0_4 = arith.constant 0 : index
    %2 = vector.load %arg4[%c0_3, %c0_4] : memref<1x2xf32, #tpu.memory_space<vmem>>, vector<1x2xf32>
    %3 = vector.broadcast %2 : vector<1x2xf32> to vector<8x2xf32>
    %4 = arith.mulf %3, %0 : vector<8x2xf32>
    %5 = vector.broadcast %1 : vector<1x2xf32> to vector<8x2xf32>
    %6 = arith.addf %5, %4 : vector<8x2xf32>
    %c0_5 = arith.constant 0 : index
    %c0_6 = arith.constant 0 : index
    %7 = vector.load %arg5[%c0_5, %c0_6] : memref<8x2xf32, #tpu.memory_space<vmem>>, vector<8x2xf32>
    tpu.vector_store %arg5[%c0_5, %c0_6], %6 {strides = array<i32>} : memref<8x2xf32, #tpu.memory_space<vmem>>, vector<8x2xf32>,
    return
  }
  func.func @transform_0(%arg0: i32, %arg1: i32) -> (i32, i32) {
    %c0_i32 = arith.constant 0 : i32
    return %arg0, %arg1 : i32, i32
  }
  func.func @transform_1(%arg0: i32, %arg1: i32) -> (i32, i32) {
    %c0_i32 = arith.constant 0 : i32
    %c0_i32_0 = arith.constant 0 : i32
    return %c0_i32, %arg1 : i32, i32
  }
  func.func @transform_2(%arg0: i32, %arg1: i32) -> (i32, i32) {
    %c0_i32 = arith.constant 0 : i32
    %c0_i32_0 = arith.constant 0 : i32
    return %c0_i32, %arg1 : i32, i32
  }
  func.func @transform_3(%arg0: i32, %arg1: i32) -> (i32, i32) {
    %c0_i32 = arith.constant 0 : i32
    return %arg0, %arg1 : i32, i32
  }
}

</mosaic_0001>

<llo_original>
// kernel: tpu_custom_call.1
$region0: #{tpu_custom_call.1}
  #allocation0 [shape = 'u32[]', space=smem, size = 0x4, offset = 0x4, fixed_abs, tag = 'smem constant byte address 0x4 - core index']
  #allocation1 [shape = 'u32[144,128]{1,0:T(1,128)}', space=vmem, size = 0x12000, scoped, tag = 'internal scratch']
  %s0 = inlined_call_operand.vmem [shape: f32[8,2], index: 0, kind: input, shape index: {}]
  %s1 = inlined_call_operand.vmem [shape: f32[1,2], index: 1, kind: input, shape index: {}]
  %s2 = inlined_call_operand.vmem [shape: f32[1,2], index: 2, kind: input, shape index: {}]
  %s3 = inlined_call_operand.vmem [shape: f32[8,2], index: 3, kind: output, shape index: {}]
  %s4 = sld [smem:[#allocation0]]
  $region22: #{tpu_custom_call.1} parent=0
    _
  %s6 = ssub.s32 1, %s4
  %s7 = scalar_select 0, %s6, %s4
  // Predicated region
  $region2: #{tpu_custom_call.1} parent=0 // pred_check
    _
  $region3: #{tpu_custom_call.1} parent=0 // pred_check_branch
    %9 = sbr.rel (0) target = $region5
  $region4: #{tpu_custom_call.1} parent=0 // pred_region
    _
  $region5: #{tpu_custom_call.1} parent=0 // pred_fallthru
    _
  // Predicated region
  $region6: #{tpu_custom_call.1} parent=0 // pred_check
    _
  $region7: #{tpu_custom_call.1} parent=0 // pred_check_branch
    %11 = sbr.rel (0) target = $region9
  $region8: #{tpu_custom_call.1} parent=0 // pred_region
    _
  $region9: #{tpu_custom_call.1} parent=0 // pred_fallthru
    _
  // Predicated region
  $region10: #{tpu_custom_call.1} parent=0 // pred_check
    _
  $region11: #{tpu_custom_call.1} parent=0 // pred_check_branch
    %13 = sbr.rel (0) target = $region13
  $region12: #{tpu_custom_call.1} parent=0 // pred_region
    _
  $region13: #{tpu_custom_call.1} parent=0 // pred_fallthru
    _
  %v14 = vld [vmem:[%s0] sm:$0xff]
  %v15 = vld [vmem:[%s1] sm:$0x1]
  %v16 = vld [vmem:[%s2] sm:$0x1]
  %v18 = vlaneseq
  %v19 = vshrl.u32 %v18, 7
  %v20 = vsub.s32 0, %v19
  %v21 = vrot.slane %v16, %v20
  %v23 = vmul.f32 %v21, %v14
  %v25 = vlaneseq
  %v26 = vshrl.u32 %v25, 7
  %v27 = vsub.s32 0, %v26
  %v28 = vrot.slane %v15, %v27
  %v30 = vadd.f32 %v28, %v23
  %vm31 = vcmask 15360
  %32 = vst.msk [vmem:[%s3] sm:$0xff] %vm31, %v30
  // Predicated region
  $region14: #{tpu_custom_call.1} parent=0 // pred_check
    _
  $region15: #{tpu_custom_call.1} parent=0 // pred_check_branch
    %34 = sbr.rel (0) target = $region17
  $region16: #{tpu_custom_call.1} parent=0 // pred_region
    _
  $region17: #{tpu_custom_call.1} parent=0 // pred_fallthru
    _
  // Predicated region
  $region18: #{tpu_custom_call.1} parent=0 // pred_check
    _
  $region19: #{tpu_custom_call.1} parent=0 // pred_check_branch
    %36 = sbr.rel (0) target = $region21
  $region20: #{tpu_custom_call.1} parent=0 // pred_region
    _
  $region21: #{tpu_custom_call.1} parent=0 // pred_fallthru
    _

</llo_original>
